<compile_context>
chip_gen: v7x
topology: tpu7x:2x2x1
jax: 0.10.0
libtpu: 0.0.40
codegen_flags: <defaults>
</compile_context>

<pallas_src>
import jax
import jax.numpy as jnp
from jax.experimental import pallas as pl
from jax.experimental.pallas import tpu as pltpu

LANE = 128
SUBLANE = 8


def _round_up(n, m):
    return ((n + m - 1) // m) * m


def _pad_axis(a, target, axis):
    pad = target - a.shape[axis]
    if pad == 0:
        return a
    widths = [(0, 0)] * a.ndim
    widths[axis] = (0, pad)
    return jnp.pad(a, widths)


def _vmem_capacity_bytes():
    """Physical VMEM per TensorCore; falls back to 128 MiB (v5e/v6e) off-TPU."""
    try:
        info = pltpu.get_tpu_info()
        return int(getattr(info, "vmem_capacity_bytes", 128 << 20))
    except Exception:
        return 128 << 20


def wgan_disc_kernel(x_ref, w1_ref, b1_ref, w2_ref, b2_ref, w3_ref, b3_ref, o_ref):
    """Fused 3-layer MLP: Linear -> ReLU -> Linear -> ReLU -> Linear(H -> 1).

    MXU matmuls take bf16 inputs with f32 accumulation; bias-add / ReLU stay in
    f32 on the VPU (mandatory on v5e).  The final Linear(H, 1) is a VPU multiply
    with the broadcast f32 weight row plus an XLU lane reduction, stored as a
    lane-dense (1, block_b) row (no masked vst.msk, no 1-column matmul).
    """
    cdt = w1_ref.dtype  # compute dtype for MXU inputs (bf16)
    x = x_ref[...].astype(cdt)

    h1 = jnp.dot(x, w1_ref[...], preferred_element_type=jnp.float32) + b1_ref[...]
    h1 = jnp.maximum(h1, 0.0)

    h2 = jnp.dot(h1.astype(cdt), w2_ref[...],
                 preferred_element_type=jnp.float32) + b2_ref[...]
    h2 = jnp.maximum(h2, 0.0)

    # Final Linear(H, 1): f32 VPU mul + XLU lane reduce; bias from SMEM scalar.
    # TODO(synk): confirm via a bundle dump that the lane reduce / relayout stays
    # hidden under the MXU work when block_b or h_pad grows (only 2 XLUs on v6e/v7x).
    out_row = jnp.sum(h2 * w3_ref[...], axis=-1) + b3_ref[0, 0]
    o_ref[...] = out_row[None, :].astype(o_ref.dtype)


def prepare_params(params, *, compute_dtype=jnp.bfloat16):
    """One-time weight prep: pad feature dims to lane multiples and cast the matmul
    weights to `compute_dtype`.  Done outside the per-call wrapper so repeated
    invocations don't pay a full HBM read+write of w1/w2 per call."""
    num_nodes, hidden = params["w1"].shape
    f_pad = _round_up(num_nodes, LANE)
    h_pad = _round_up(hidden, LANE)

    w1 = _pad_axis(_pad_axis(params["w1"], f_pad, 0), h_pad, 1).astype(compute_dtype)
    b1 = _pad_axis(params["b1"], h_pad, 1).astype(jnp.float32)
    w2 = _pad_axis(_pad_axis(params["w2"], h_pad, 0), h_pad, 1).astype(compute_dtype)
    b2 = _pad_axis(params["b2"], h_pad, 1).astype(jnp.float32)
    # w3 stays f32: it feeds the VPU multiply (v5e VPU has no bf16) and is tiny.
    w3 = _pad_axis(params["w3"].reshape(1, hidden), h_pad, 1).astype(jnp.float32)
    b3 = params["b3"].reshape(1, 1).astype(jnp.float32)

    return {"w1": w1, "b1": b1, "w2": w2, "b2": b2, "w3": w3, "b3": b3,
            "num_nodes": num_nodes, "hidden": hidden,
            "f_pad": f_pad, "h_pad": h_pad}


def _select_block_b(b_pad, f_pad, h_pad, vmem_cap):
    """Generation-aware batch tile width.

    v7x (64 MiB VMEM, 2 TCs): smaller tiles when features are large, and at least
    2 grid steps when the batch allows so both TensorCores get work.
    v5e/v6e (128 MiB, 1 TC): keep 512-1024 wide tiles to amortize per-step overhead.
    """
    small_vmem = vmem_cap < (96 << 20)   # v7x
    if small_vmem:
        block_b = 256 if max(f_pad, h_pad) >= 4096 else 512
    else:
        block_b = 1024 if max(f_pad, h_pad) <= 2048 else 512
    block_b = max(SUBLANE, _round_up(block_b, SUBLANE))

    if b_pad <= block_b:
        if small_vmem and b_pad >= 2 * LANE:
            # split into >=2 lane-multiple tiles so both v7x TCs are used
            block_b = max(LANE, (b_pad // 2) // LANE * LANE)
        else:
            block_b = b_pad            # single tile; block == full array dims
    else:
        block_b = _round_up(block_b, LANE)   # lane-dense output tiles
    return block_b


def wgan_discriminator(x, prepared, *, block_b=None):
    """x: (B, num_nodes) f32.  prepared: output of prepare_params()."""
    B, num_nodes = x.shape
    assert num_nodes == prepared["num_nodes"]
    f_pad, h_pad = prepared["f_pad"], prepared["h_pad"]
    w_itemsize = jnp.dtype(prepared["w1"].dtype).itemsize
    x_itemsize = jnp.dtype(x.dtype).itemsize
    vmem_cap = _vmem_capacity_bytes()

    b_pad = _round_up(B, SUBLANE)
    if block_b is None:
        block_b = _select_block_b(b_pad, f_pad, h_pad, vmem_cap)
    else:
        block_b = max(SUBLANE, _round_up(block_b, SUBLANE))
        if b_pad <= block_b:
            block_b = b_pad
        else:
            block_b = _round_up(block_b, LANE)
    if block_b < b_pad:
        b_pad = _round_up(b_pad, block_b)
    grid = (b_pad // block_b,)

    # Only x is padded per call (zero rows/columns are value-preserving).
    x_p = _pad_axis(_pad_axis(x, b_pad, 0), f_pad, 1)

    # Explicit VMEM budget: single-buffered weights + double-buffered x/out tiles
    # + f32 h1/h2 intermediates, with headroom, capped per generation.
    weight_bytes = (f_pad * h_pad + h_pad * h_pad) * w_itemsize + (3 * h_pad + 1) * 4
    x_tile_bytes = 2 * block_b * f_pad * x_itemsize
    out_tile_bytes = 2 * block_b * 4
    interm_bytes = 2 * block_b * h_pad * 4
    vmem_needed = weight_bytes + x_tile_bytes + out_tile_bytes + interm_bytes
    cap = (56 << 20) if vmem_cap < (96 << 20) else (100 << 20)
    vmem_limit = int(min(cap, max(32 << 20, int(vmem_needed * 1.5))))

    flops = 2 * b_pad * (f_pad * h_pad + h_pad * h_pad + h_pad)
    bytes_accessed = (b_pad * f_pad * x_itemsize
                      + (f_pad * h_pad + h_pad * h_pad) * w_itemsize
                      + (3 * h_pad + 1) * 4
                      + b_pad * 4)

    def _resident(shape):
        # Constant index_map -> weights stay VMEM-resident; single-buffer them
        # (double-buffering a never-changing block only wastes VMEM).
        idx = lambda i: (0, 0)
        try:
            return pl.BlockSpec(shape, idx, pipeline_mode=pl.Buffered(1))
        except TypeError:  # older BlockSpec without pipeline_mode kwarg
            return pl.BlockSpec(shape, idx)

    out_padded = pl.pallas_call(
        wgan_disc_kernel,
        out_shape=jax.ShapeDtypeStruct((1, b_pad), jnp.float32),
        grid=grid,
        in_specs=[
            pl.BlockSpec((block_b, f_pad), lambda i: (i, 0)),   # x tile (pipelined)
            _resident((f_pad, h_pad)),                           # w1 (bf16, resident)
            _resident((1, h_pad)),                               # b1 (f32)
            _resident((h_pad, h_pad)),                           # w2 (bf16, resident)
            _resident((1, h_pad)),                               # b2 (f32)
            _resident((1, h_pad)),                               # w3 row (f32)
            pl.BlockSpec(memory_space=pltpu.MemorySpace.SMEM),   # b3 scalar
        ],
        out_specs=pl.BlockSpec((1, block_b), lambda i: (0, i)),  # lane-dense output
        compiler_params=pltpu.CompilerParams(
            dimension_semantics=("parallel",),
            vmem_limit_bytes=vmem_limit,
        ),
        cost_estimate=pl.CostEstimate(
            flops=flops, transcendentals=0, bytes_accessed=bytes_accessed),
    )(x_p, prepared["w1"], prepared["b1"], prepared["w2"], prepared["b2"],
      prepared["w3"], prepared["b3"])

    return out_padded[0, :B].reshape(B, 1)


def init_params(key, num_nodes, hidden_size):
    """Deterministic init mirroring nn.Linear shapes (stored transposed, f32)."""
    k1, k2, k3, k4, k5, k6 = jax.random.split(key, 6)

    def uniform(k, shape, fan_in):
        bound = 1.0 / jnp.sqrt(fan_in)
        return jax.random.uniform(k, shape, jnp.float32, -bound, bound)

    # PyTorch Linear stores (out, in); we store (in, out) so kernel does x @ W.
    return {
        "w1": uniform(k1, (num_nodes, hidden_size), num_nodes),
        "b1": uniform(k2, (1, hidden_size), num_nodes),
        "w2": uniform(k3, (hidden_size, hidden_size), hidden_size),
        "b2": uniform(k4, (hidden_size, hidden_size // hidden_size), hidden_size)[:, :1].reshape(1, 1) * 0  # placeholder, replaced below
        if False else uniform(k4, (1, hidden_size), hidden_size),
        "w3": uniform(k5, (hidden_size, 1), hidden_size),
        "b3": uniform(k6, (1, 1), hidden_size),
    }


def reference(x, p, compute_dtype=jnp.bfloat16):
    """Pure-JAX reference mimicking the kernel's dtype handling
    (bf16 matmul inputs, f32 accumulate, f32 bias/ReLU, f32 final layer)."""
    w1 = p["w1"].astype(compute_dtype)
    w2 = p["w2"].astype(compute_dtype)
    h1 = jnp.dot(x.astype(compute_dtype), w1,
                 preferred_element_type=jnp.float32) + p["b1"]
    h1 = jnp.maximum(h1, 0.0)
    h2 = jnp.dot(h1.astype(compute_dtype), w2,
                 preferred_element_type=jnp.float32) + p["b2"]
    h2 = jnp.maximum(h2, 0.0)
    return h2 @ p["w3"] + p["b3"]


if __name__ == "__main__":
    num_nodes = 16
    hidden_size = 32
    batch = 8

    key = jax.random.PRNGKey(0)
    kx, kp = jax.random.split(key)
    x = jax.random.normal(kx, (batch, num_nodes), dtype=jnp.float32)
    params = init_params(kp, num_nodes, hidden_size)

    prepared = prepare_params(params)           # pad + bf16-cast once
    out = wgan_discriminator(x, prepared)
    out = jax.block_until_ready(out)

    ref = reference(x, params)
    assert out.shape == (batch, 1)
    assert jnp.allclose(out, ref, atol=1e-4, rtol=1e-4), "mismatch vs reference"

    print("KERNEL_OK")
</pallas_src>

<mosaic_0001>
module attributes {stable_mosaic.version = 11 : i64} {
  func.func @wgan_disc_kernel(%arg0: i32, %arg1: memref<8x128xf32, #tpu.memory_space<vmem>>, %arg2: memref<128x128xbf16, #tpu.memory_space<vmem>>, %arg3: memref<1x128xf32, #tpu.memory_space<vmem>>, %arg4: memref<128x128xbf16, #tpu.memory_space<vmem>>, %arg5: memref<1x128xf32, #tpu.memory_space<vmem>>, %arg6: memref<1x128xf32, #tpu.memory_space<vmem>>, %arg7: memref<1x1xf32, #tpu.memory_space<smem>>, %arg8: memref<1x8xf32, #tpu.memory_space<vmem>>) attributes {dimension_semantics = [#tpu.dimension_semantics<parallel>], iteration_bounds = array<i64: 1>, scalar_prefetch = 0 : i64, scratch_operands = 0 : i64, tpu.core_type = #tpu.core_type<tc>, window_params = [{transform_indices = @transform_0, window_bounds = array<i64: 8, 128>}, {pipeline_mode = #tpu.pipeline_mode<synchronous>, transform_indices = @transform_1, window_bounds = array<i64: 128, 128>}, {pipeline_mode = #tpu.pipeline_mode<synchronous>, transform_indices = @transform_2, window_bounds = array<i64: 1, 128>}, {pipeline_mode = #tpu.pipeline_mode<synchronous>, transform_indices = @transform_3, window_bounds = array<i64: 128, 128>}, {pipeline_mode = #tpu.pipeline_mode<synchronous>, transform_indices = @transform_4, window_bounds = array<i64: 1, 128>}, {pipeline_mode = #tpu.pipeline_mode<synchronous>, transform_indices = @transform_5, window_bounds = array<i64: 1, 128>}, {transform_indices = @transform_6, window_bounds = array<i64: 1, 1>}, {transform_indices = @transform_7, window_bounds = array<i64: 1, 8>}]} {
    %c0 = arith.constant 0 : index
    %c0_0 = arith.constant 0 : index
    %0 = vector.load %arg1[%c0, %c0_0] : memref<8x128xf32, #tpu.memory_space<vmem>>, vector<8x128xf32>
    %1 = arith.truncf %0 : vector<8x128xf32> to vector<8x128xbf16>
    %c0_1 = arith.constant 0 : index
    %c0_2 = arith.constant 0 : index
    %2 = vector.load %arg2[%c0_1, %c0_2] : memref<128x128xbf16, #tpu.memory_space<vmem>>, vector<128x128xbf16>
    %cst = arith.constant dense<0.000000e+00> : vector<8x128xf32>
    %3 = tpu.matmul %1, %2, %cst {dimension_numbers = #tpu.dot_dimension_numbers<[1], [0], [0], [1], [0, 0, 1, 1], [], []>} : vector<8x128xbf16>, vector<128x128xbf16>, vector<8x128xf32> -> vector<8x128xf32>
    %c0_3 = arith.constant 0 : index
    %c0_4 = arith.constant 0 : index
    %4 = vector.load %arg3[%c0_3, %c0_4] : memref<1x128xf32, #tpu.memory_space<vmem>>, vector<1x128xf32>
    %5 = vector.broadcast %4 : vector<1x128xf32> to vector<8x128xf32>
    %6 = arith.addf %3, %5 : vector<8x128xf32>
    %cst_5 = arith.constant 0.000000e+00 : f32
    %7 = vector.broadcast %cst_5 : f32 to vector<8x128xf32>
    %8 = arith.maximumf %6, %7 : vector<8x128xf32>
    %9 = arith.truncf %8 : vector<8x128xf32> to vector<8x128xbf16>
    %c0_6 = arith.constant 0 : index
    %c0_7 = arith.constant 0 : index
    %10 = vector.load %arg4[%c0_6, %c0_7] : memref<128x128xbf16, #tpu.memory_space<vmem>>, vector<128x128xbf16>
    %cst_8 = arith.constant dense<0.000000e+00> : vector<8x128xf32>
    %11 = tpu.matmul %9, %10, %cst_8 {dimension_numbers = #tpu.dot_dimension_numbers<[1], [0], [0], [1], [0, 0, 1, 1], [], []>} : vector<8x128xbf16>, vector<128x128xbf16>, vector<8x128xf32> -> vector<8x128xf32>
    %c0_9 = arith.constant 0 : index
    %c0_10 = arith.constant 0 : index
    %12 = vector.load %arg5[%c0_9, %c0_10] : memref<1x128xf32, #tpu.memory_space<vmem>>, vector<1x128xf32>
    %13 = vector.broadcast %12 : vector<1x128xf32> to vector<8x128xf32>
    %14 = arith.addf %11, %13 : vector<8x128xf32>
    %cst_11 = arith.constant 0.000000e+00 : f32
    %15 = vector.broadcast %cst_11 : f32 to vector<8x128xf32>
    %16 = arith.maximumf %14, %15 : vector<8x128xf32>
    %c0_12 = arith.constant 0 : index
    %c0_13 = arith.constant 0 : index
    %17 = vector.load %arg6[%c0_12, %c0_13] : memref<1x128xf32, #tpu.memory_space<vmem>>, vector<1x128xf32>
    %18 = vector.broadcast %17 : vector<1x128xf32> to vector<8x128xf32>
    %19 = arith.mulf %16, %18 : vector<8x128xf32>
    %cst_14 = arith.constant dense<0.000000e+00> : vector<8xf32>
    %20 = vector.multi_reduction <add>, %19, %cst_14 [1] : vector<8x128xf32> to vector<8xf32>
    %c0_15 = arith.constant 0 : index
    %c0_16 = arith.constant 0 : index
    %21 = memref.load %arg7[%c0_15, %c0_16] : memref<1x1xf32, #tpu.memory_space<smem>>
    %22 = vector.broadcast %21 : f32 to vector<8xf32>
    %23 = arith.addf %20, %22 : vector<8xf32>
    %24 = vector.shape_cast %23 : vector<8xf32> to vector<1x8xf32>
    %c0_17 = arith.constant 0 : index
    %c0_18 = arith.constant 0 : index
    %25 = vector.load %arg8[%c0_17, %c0_18] : memref<1x8xf32, #tpu.memory_space<vmem>>, vector<1x8xf32>
    tpu.vector_store %arg8[%c0_17, %c0_18], %24 {strides = array<i32>} : memref<1x8xf32, #tpu.memory_space<vmem>>, vector<1x8xf32>,
    return
  }
  func.func @transform_0(%arg0: i32) -> (i32, i32) {
    %c0_i32 = arith.constant 0 : i32
    %c0_i32_0 = arith.constant 0 : i32
    return %arg0, %c0_i32 : i32, i32
  }
  func.func @transform_1(%arg0: i32) -> (i32, i32) {
    %c0_i32 = arith.constant 0 : i32
    %c0_i32_0 = arith.constant 0 : i32
    %c0_i32_1 = arith.constant 0 : i32
    return %c0_i32, %c0_i32_0 : i32, i32
  }
  func.func @transform_2(%arg0: i32) -> (i32, i32) {
    %c0_i32 = arith.constant 0 : i32
    %c0_i32_0 = arith.constant 0 : i32
    %c0_i32_1 = arith.constant 0 : i32
    return %c0_i32, %c0_i32_0 : i32, i32
  }
  func.func @transform_3(%arg0: i32) -> (i32, i32) {
    %c0_i32 = arith.constant 0 : i32
    %c0_i32_0 = arith.constant 0 : i32
    %c0_i32_1 = arith.constant 0 : i32
    return %c0_i32, %c0_i32_0 : i32, i32
  }
  func.func @transform_4(%arg0: i32) -> (i32, i32) {
    %c0_i32 = arith.constant 0 : i32
    %c0_i32_0 = arith.constant 0 : i32
    %c0_i32_1 = arith.constant 0 : i32
    return %c0_i32, %c0_i32_0 : i32, i32
  }
  func.func @transform_5(%arg0: i32) -> (i32, i32) {
    %c0_i32 = arith.constant 0 : i32
    %c0_i32_0 = arith.constant 0 : i32
    %c0_i32_1 = arith.constant 0 : i32
    return %c0_i32, %c0_i32_0 : i32, i32
  }
  func.func @transform_6(%arg0: i32) -> (i32, i32) {
    %c0_i32 = arith.constant 0 : i32
    %c0_i32_0 = arith.constant 0 : i32
    %c0_i32_1 = arith.constant 0 : i32
    return %c0_i32, %c0_i32_0 : i32, i32
  }
  func.func @transform_7(%arg0: i32) -> (i32, i32) {
    %c0_i32 = arith.constant 0 : i32
    %c0_i32_0 = arith.constant 0 : i32
    return %c0_i32, %arg0 : i32, i32
  }
}

</mosaic_0001>

<llo_original>
// kernel: tpu_custom_call.1
$region0: #{tpu_custom_call.1}
  #allocation0 [shape = 'u32[]', space=smem, size = 0x4, offset = 0x4, fixed_abs, tag = 'smem constant byte address 0x4 - core index']
  #allocation1 [shape = 'u32[144,128]{1,0:T(1,128)}', space=vmem, size = 0x12000, scoped, tag = 'internal scratch']
  #allocation2 [shape = 'f32[1,1]{1,0:T(1,128)S(6)}', space=smem, size = 0x200, scoped, tag = 'scoped memory for tpu_custom_call.1']
  %s0 = inlined_call_operand.hbm [shape: f32[8,128], index: 0, kind: input, shape index: {}]
  %s1 = inlined_call_operand.hbm [shape: bf16[128,128], index: 1, kind: input, shape index: {}]
  %s2 = inlined_call_operand.vmem [shape: f32[1,128], index: 2, kind: input, shape index: {}]
  %s3 = inlined_call_operand.hbm [shape: bf16[128,128], index: 3, kind: input, shape index: {}]
  %s4 = inlined_call_operand.vmem [shape: f32[1,128], index: 4, kind: input, shape index: {}]
  %s5 = inlined_call_operand.vmem [shape: f32[1,128], index: 5, kind: input, shape index: {}]
  %s6 = inlined_call_operand.<no memory space> [shape: f32[1,1], index: 6, kind: input, shape index: {}]
  %s7 = inlined_call_operand.hbm [shape: f32[1,8], index: 7, kind: output, shape index: {}]
  %s8 = sld [smem:[#allocation0]]
  $region50: #{tpu_custom_call.1} parent=0
    _
  %s10 = ssub.s32 1, %s8
  %s11 = scalar_select 0, %s10, %s8
  %12 = sst [smem:[#allocation2]] %s6
  $region1: #{tpu_custom_call.1} parent=0
    #allocation3 [shape = 'u8[4096]{0}', space=vmem, size = 0x1000, scoped, tag = 'input window, operand 0, single buffered']
    #allocation4 [shape = 's32[1]{0}', space=sflag, size = 0x4, scoped, tag = 'scoped memory for tpu_custom_call.1']
    #allocation5 [shape = 's32[1]{0}', space=sflag, size = 0x4, scoped, tag = 'scoped memory for tpu_custom_call.1']
    #allocation6 [shape = 'u8[32768]{0}', space=vmem, size = 0x8000, scoped, tag = 'input window, operand 1, single buffered']
    #allocation7 [shape = 's32[1]{0}', space=sflag, size = 0x4, scoped, tag = 'scoped memory for tpu_custom_call.1']
    #allocation8 [shape = 'u8[32768]{0}', space=vmem, size = 0x8000, scoped, tag = 'input window, operand 3, single buffered']
    #allocation9 [shape = 'u8[512]{0}', space=vmem, size = 0x400, scoped, tag = 'output window, operand 0, single buffered']
    %13 = vsyncpa [#allocation4], 0
    %14 = vsyncpa [#allocation7], 0
    %15 = vsyncpa [#allocation5], 0
    // Predicated region
    $region2: #{tpu_custom_call.1} parent=1 // pred_check
      _
    $region3: #{tpu_custom_call.1} parent=1 // pred_check_branch
      %17 = sbr.rel (0) target = $region5
    $region4: #{tpu_custom_call.1} parent=1 // pred_region
      %s19 = ssub.s32 128, 128
      %20 = vsyncadd [#allocation4], %s19
      %s22 = sshll.u32 [#allocation3], 4
      %s23 = int_to_ptr.vmem [resolvable:$true] %s22
      %25 = dma.hbm_to_vmem [thread:$0]  %s0, 128, %s23, [#allocation4]
    $region5: #{tpu_custom_call.1} parent=1 // pred_fallthru
      _
    // Predicated region
    $region6: #{tpu_custom_call.1} parent=1 // pred_check
      _
    $region7: #{tpu_custom_call.1} parent=1 // pred_check_branch
      %27 = sbr.rel (0) target = $region9
    $region8: #{tpu_custom_call.1} parent=1 // pred_region
      %s29 = ssub.s32 1024, 1024
      %30 = vsyncadd [#allocation7], %s29
      %s31 = sshll.u32 [#allocation6], 4
      %s32 = int_to_ptr.vmem [resolvable:$true] %s31
      %37 = dma.hbm_to_vmem [thread:$0]  %s1, 1024, %s32, [#allocation7], 64, 64, 4
    $region9: #{tpu_custom_call.1} parent=1 // pred_fallthru
      _
    // Predicated region
    $region10: #{tpu_custom_call.1} parent=1 // pred_check
      _
    $region11: #{tpu_custom_call.1} parent=1 // pred_check_branch
      %39 = sbr.rel (0) target = $region13
    $region12: #{tpu_custom_call.1} parent=1 // pred_region
      _
    $region13: #{tpu_custom_call.1} parent=1 // pred_fallthru
      _
    // Predicated region
    $region14: #{tpu_custom_call.1} parent=1 // pred_check
      _
    $region15: #{tpu_custom_call.1} parent=1 // pred_check_branch
      %41 = sbr.rel (0) target = $region17
    $region16: #{tpu_custom_call.1} parent=1 // pred_region
      %s43 = ssub.s32 1024, 1024
      %44 = vsyncadd [#allocation7], %s43
      %s45 = sshll.u32 [#allocation8], 4
      %s46 = int_to_ptr.vmem [resolvable:$true] %s45
      %51 = dma.hbm_to_vmem [thread:$0]  %s3, 1024, %s46, [#allocation7], 64, 64, 4
    $region17: #{tpu_custom_call.1} parent=1 // pred_fallthru
      _
    // Predicated region
    $region18: #{tpu_custom_call.1} parent=1 // pred_check
      _
    $region19: #{tpu_custom_call.1} parent=1 // pred_check_branch
      %53 = sbr.rel (0) target = $region21
    $region20: #{tpu_custom_call.1} parent=1 // pred_region
      _
    $region21: #{tpu_custom_call.1} parent=1 // pred_fallthru
      _
    // Predicated region
    $region22: #{tpu_custom_call.1} parent=1 // pred_check
      _
    $region23: #{tpu_custom_call.1} parent=1 // pred_check_branch
      %55 = sbr.rel (0) target = $region25
    $region24: #{tpu_custom_call.1} parent=1 // pred_region
      _
    $region25: #{tpu_custom_call.1} parent=1 // pred_fallthru
      _
    // Predicated region
    $region26: #{tpu_custom_call.1} parent=1 // pred_check
      _
    $region27: #{tpu_custom_call.1} parent=1 // pred_check_branch
      %57 = sbr.rel (0) target = $region29
    $region28: #{tpu_custom_call.1} parent=1 // pred_region
      _
    $region29: #{tpu_custom_call.1} parent=1 // pred_fallthru
      _
    // Predicated region
    $region30: #{tpu_custom_call.1} parent=1 // pred_check
      _
    $region31: #{tpu_custom_call.1} parent=1 // pred_check_branch
      %59 = sbr.rel (0) target = $region33
    $region32: #{tpu_custom_call.1} parent=1 // pred_region
      %60 = dma.done [#allocation4], 128
    $region33: #{tpu_custom_call.1} parent=1 // pred_fallthru
      _
    // Predicated region
    $region34: #{tpu_custom_call.1} parent=1 // pred_check
      _
    $region35: #{tpu_custom_call.1} parent=1 // pred_check_branch
      %62 = sbr.rel (0) target = $region37
    $region36: #{tpu_custom_call.1} parent=1 // pred_region
      %63 = dma.done [#allocation7], 1024
    $region37: #{tpu_custom_call.1} parent=1 // pred_fallthru
      _
    // Predicated region
    $region38: #{tpu_custom_call.1} parent=1 // pred_check
      _
    $region39: #{tpu_custom_call.1} parent=1 // pred_check_branch
      %65 = sbr.rel (0) target = $region41
    $region40: #{tpu_custom_call.1} parent=1 // pred_region
      %66 = dma.done [#allocation7], 1024
    $region41: #{tpu_custom_call.1} parent=1 // pred_fallthru
      _
    %v68 = vld [vmem:[#allocation3] sm:$0xff]
    %v69 = vpack.c.bf16 %v68, %v68
    %v70 = vld [vmem:[#allocation6] sm:$0xf]
    %v71 = vld [vmem:[#allocation6 + $0x4] sm:$0xf]
    %v72 = vld [vmem:[#allocation6 + $0x8] sm:$0xf]
    %v73 = vld [vmem:[#allocation6 + $0xc] sm:$0xf]
    %v74 = vld [vmem:[#allocation6 + $0x10] sm:$0xf]
    %v75 = vld [vmem:[#allocation6 + $0x14] sm:$0xf]
    %v76 = vld [vmem:[#allocation6 + $0x18] sm:$0xf]
    %v77 = vld [vmem:[#allocation6 + $0x1c] sm:$0xf]
    %v78 = vld [vmem:[#allocation6 + $0x20] sm:$0xf]
    %v79 = vld [vmem:[#allocation6 + $0x24] sm:$0xf]
    %v80 = vld [vmem:[#allocation6 + $0x28] sm:$0xf]
    %v81 = vld [vmem:[#allocation6 + $0x2c] sm:$0xf]
    %v82 = vld [vmem:[#allocation6 + $0x30] sm:$0xf]
    %v83 = vld [vmem:[#allocation6 + $0x34] sm:$0xf]
    %v84 = vld [vmem:[#allocation6 + $0x38] sm:$0xf]
    %v85 = vld [vmem:[#allocation6 + $0x3c] sm:$0xf]
    %v86 = vld [vmem:[%s2] sm:$0x1]
    %v88 = vlaneseq
    %v89 = vshrl.u32 %v88, 7
    %v90 = vsub.s32 0, %v89
    %v91 = vrot.slane %v86, %v90
    %v109 = vunpack.c.l.b16 %v70
    %v110 = vunpack.c.l.b16 %v71
    %v111 = vunpack.c.l.b16 %v72
    %v112 = vunpack.c.l.b16 %v73
    %v113 = vunpack.c.l.b16 %v74
    %v114 = vunpack.c.l.b16 %v75
    %v115 = vunpack.c.l.b16 %v76
    %v116 = vunpack.c.l.b16 %v77
    %v117 = vunpack.c.l.b16 %v78
    %v118 = vunpack.c.l.b16 %v79
    %v119 = vunpack.c.l.b16 %v80
    %v120 = vunpack.c.l.b16 %v81
    %v121 = vunpack.c.l.b16 %v82
    %v122 = vunpack.c.l.b16 %v83
    %v123 = vunpack.c.l.b16 %v84
    %v124 = vunpack.c.l.b16 %v85
    %v125 = vpack.c.b16 %v110, %v109
    %v126 = vpack.c.b16 %v112, %v111
    %v127 = vpack.c.b16 %v114, %v113
    %v128 = vpack.c.b16 %v116, %v115
    %v129 = vpack.c.b16 %v118, %v117
    %v130 = vpack.c.b16 %v120, %v119
    %v131 = vpack.c.b16 %v122, %v121
    %v132 = vpack.c.b16 %v124, %v123
    %141 = vmatprep.subr.bf16.mxu0 0
    %142 = vmatpush1.bf16.msra.mxu0 %v125
    %143 = vmatprep.subr.bf16.mxu0 0
    %144 = vmatpush1.bf16.msra.mxu0 %v126
    %145 = vmatprep.subr.bf16.mxu0 0
    %146 = vmatpush1.bf16.msra.mxu0 %v127
    %147 = vmatprep.subr.bf16.mxu0 0
    %148 = vmatpush1.bf16.msra.mxu0 %v128
    %149 = vmatprep.subr.bf16.mxu0 0
    %150 = vmatpush1.bf16.msra.mxu0 %v129
    %151 = vmatprep.subr.bf16.mxu0 0
    %152 = vmatpush1.bf16.msra.mxu0 %v130
    %153 = vmatprep.subr.bf16.mxu0 0
    %154 = vmatpush1.bf16.msra.mxu0 %v131
    %155 = vmatprep.subr.bf16.mxu0 0
    %156 = vmatpush1.bf16.msra.mxu0 %v132
    %157 = vmatprep.subr.bf16.mxu0 0
    %158 = vmatpush1.bf16.msra.mxu0 0
    %159 = vmatprep.subr.bf16.mxu0 0
    %160 = vmatpush1.bf16.msra.mxu0 0
    %161 = vmatprep.subr.bf16.mxu0 0
    %162 = vmatpush1.bf16.msra.mxu0 0
    %163 = vmatprep.subr.bf16.mxu0 0
    %164 = vmatpush1.bf16.msra.mxu0 0
    %165 = vmatprep.subr.bf16.mxu0 0
    %166 = vmatpush1.bf16.msra.mxu0 0
    %167 = vmatprep.subr.bf16.mxu0 0
    %168 = vmatpush1.bf16.msra.mxu0 0
    %169 = vmatprep.subr.bf16.mxu0 0
    %170 = vmatpush1.bf16.msra.mxu0 0
    %171 = vmatprep.subr.bf16.mxu0 0
    %172 = vmatpush1.bf16.msra.mxu0 0
    %173 = vmatprep.mubr.bf16.mxu0 0
    %174 = vmatmul.mubr.bf16.gmra.mrb[0].mxu0 %v69
    %v175 = vpop.f32.mrb[0].mxu0
    %v176 = vadd.f32 %v91, %v175
    %v177 = vpop.f32.mrb[0].mxu0
    %v178 = vpop.f32.mrb[0].mxu0
    %v179 = vpop.f32.mrb[0].mxu0
    %180 = vdwg.mxu0
    %v181 = vmax.f32 %v176, 0.0
    %v182 = vpack.c.bf16 %v181, %v181
    %v183 = vld [vmem:[#allocation8] sm:$0xf]
    %v184 = vld [vmem:[#allocation8 + $0x4] sm:$0xf]
    %v185 = vld [vmem:[#allocation8 + $0x8] sm:$0xf]
    %v186 = vld [vmem:[#allocation8 + $0xc] sm:$0xf]
    %v187 = vld [vmem:[#allocation8 + $0x10] sm:$0xf]
    %v188 = vld [vmem:[#allocation8 + $0x14] sm:$0xf]
    %v189 = vld [vmem:[#allocation8 + $0x18] sm:$0xf]
    %v190 = vld [vmem:[#allocation8 + $0x1c] sm:$0xf]
    %v191 = vld [vmem:[#allocation8 + $0x20] sm:$0xf]
    %v192 = vld [vmem:[#allocation8 + $0x24] sm:$0xf]
    %v193 = vld [vmem:[#allocation8 + $0x28] sm:$0xf]
    %v194 = vld [vmem:[#allocation8 + $0x2c] sm:$0xf]
    %v195 = vld [vmem:[#allocation8 + $0x30] sm:$0xf]
    %v196 = vld [vmem:[#allocation8 + $0x34] sm:$0xf]
    %v197 = vld [vmem:[#allocation8 + $0x38] sm:$0xf]
    %v198 = vld [vmem:[#allocation8 + $0x3c] sm:$0xf]
    %v199 = vld [vmem:[%s4] sm:$0x1]
    %v201 = vlaneseq
    %v202 = vshrl.u32 %v201, 7
    %v203 = vsub.s32 0, %v202
    %v204 = vrot.slane %v199, %v203
    %v222 = vunpack.c.l.b16 %v183
    %v223 = vunpack.c.l.b16 %v184
    %v224 = vunpack.c.l.b16 %v185
    %v225 = vunpack.c.l.b16 %v186
    %v226 = vunpack.c.l.b16 %v187
    %v227 = vunpack.c.l.b16 %v188
    %v228 = vunpack.c.l.b16 %v189
    %v229 = vunpack.c.l.b16 %v190
    %v230 = vunpack.c.l.b16 %v191
    %v231 = vunpack.c.l.b16 %v192
    %v232 = vunpack.c.l.b16 %v193
    %v233 = vunpack.c.l.b16 %v194
    %v234 = vunpack.c.l.b16 %v195
    %v235 = vunpack.c.l.b16 %v196
    %v236 = vunpack.c.l.b16 %v197
    %v237 = vunpack.c.l.b16 %v198
    %v238 = vpack.c.b16 %v223, %v222
    %v239 = vpack.c.b16 %v225, %v224
    %v240 = vpack.c.b16 %v227, %v226
    %v241 = vpack.c.b16 %v229, %v228
    %v242 = vpack.c.b16 %v231, %v230
    %v243 = vpack.c.b16 %v233, %v232
    %v244 = vpack.c.b16 %v235, %v234
    %v245 = vpack.c.b16 %v237, %v236
    %254 = vmatprep.subr.bf16.mxu0 0
    %255 = vmatpush1.bf16.msra.mxu0 %v238
    %256 = vmatprep.subr.bf16.mxu0 0
    %257 = vmatpush1.bf16.msra.mxu0 %v239
    %258 = vmatprep.subr.bf16.mxu0 0
    %259 = vmatpush1.bf16.msra.mxu0 %v240
    %260 = vmatprep.subr.bf16.mxu0 0
    %261 = vmatpush1.bf16.msra.mxu0 %v241
    %262 = vmatprep.subr.bf16.mxu0 0
    %263 = vmatpush1.bf16.msra.mxu0 %v242
    %264 = vmatprep.subr.bf16.mxu0 0
    %265 = vmatpush1.bf16.msra.mxu0 %v243
    %266 = vmatprep.subr.bf16.mxu0 0
    %267 = vmatpush1.bf16.msra.mxu0 %v244
    %268 = vmatprep.subr.bf16.mxu0 0
    %269 = vmatpush1.bf16.msra.mxu0 %v245
    %270 = vmatprep.subr.bf16.mxu0 0
    %271 = vmatpush1.bf16.msra.mxu0 0
    %272 = vmatprep.subr.bf16.mxu0 0
    %273 = vmatpush1.bf16.msra.mxu0 0
    %274 = vmatprep.subr.bf16.mxu0 0
    %275 = vmatpush1.bf16.msra.mxu0 0
    %276 = vmatprep.subr.bf16.mxu0 0
    %277 = vmatpush1.bf16.msra.mxu0 0
    %278 = vmatprep.subr.bf16.mxu0 0
    %279 = vmatpush1.bf16.msra.mxu0 0
    %280 = vmatprep.subr.bf16.mxu0 0
    %281 = vmatpush1.bf16.msra.mxu0 0
    %282 = vmatprep.subr.bf16.mxu0 0
    %283 = vmatpush1.bf16.msra.mxu0 0
    %284 = vmatprep.subr.bf16.mxu0 0
    %285 = vmatpush1.bf16.msra.mxu0 0
    %286 = vmatprep.mubr.bf16.mxu0 0
    %287 = vmatmul.mubr.bf16.gmra.mrb[0].mxu0 %v182
    %v288 = vpop.f32.mrb[0].mxu0
    %v289 = vadd.f32 %v204, %v288
    %v290 = vpop.f32.mrb[0].mxu0
    %v291 = vpop.f32.mrb[0].mxu0
    %v292 = vpop.f32.mrb[0].mxu0
    %293 = vdwg.mxu0
    %v294 = vmax.f32 %v289, 0.0
    %v295 = vld [vmem:[%s5] sm:$0x1]
    %v297 = vlaneseq
    %v298 = vshrl.u32 %v297, 7
    %v299 = vsub.s32 0, %v298
    %v300 = vrot.slane %v295, %v299
    %v302 = vmul.f32 %v294, %v300
    %303 = vadd.xlane.f32.xlu0 %v302
    %v304 = vpop.xlane.xlu0 %303
    %s305 = sld [smem:[#allocation2]]
    %v306 = vstv %s305
    %v307 = vadd.f32 %v304, %v306
    %v309 = vlaneseq
    %v310 = vand.u32 %v309, 127
    %v311 = vlaneseq
    %v312 = vshrl.u32 %v311, 7
    %v313 = vsub.s32 %v310, %v312
    %v314 = vrot.slane %v307, %v313
    %vm316 = vcmask 57344
    %317 = vst.msk [vmem:[#allocation9] sm:$0x1] %vm316, %v314
    // Predicated region
    $region42: #{tpu_custom_call.1} parent=1 // pred_check
      _
    $region43: #{tpu_custom_call.1} parent=1 // pred_check_branch
      %319 = sbr.rel (0) target = $region45
    $region44: #{tpu_custom_call.1} parent=1 // pred_region
      %s321 = ssub.s32 16, 16
      %322 = vsyncadd [#allocation5], %s321
      %s324 = sshll.u32 [#allocation9], 4
      %s325 = int_to_ptr.vmem [resolvable:$true] %s324
      %327 = dma.vmem_to_hbm [thread:$0]  %s325, 16, %s7, [#allocation5]
    $region45: #{tpu_custom_call.1} parent=1 // pred_fallthru
      _
    // Predicated region
    $region46: #{tpu_custom_call.1} parent=1 // pred_check
      _
    $region47: #{tpu_custom_call.1} parent=1 // pred_check_branch
      %329 = sbr.rel (0) target = $region49
    $region48: #{tpu_custom_call.1} parent=1 // pred_region
      %330 = dma.done [#allocation5], 16
    $region49: #{tpu_custom_call.1} parent=1 // pred_fallthru
      _
    %331 = vsyncpa [#allocation4], 1
    %332 = vsyncpa [#allocation7], 1
    %333 = vsyncpa [#allocation5], 1

</llo_original>
